<compile_context>
chip_gen: v7x
topology: tpu7x:2x2x1
jax: 0.10.0
libtpu: 0.0.40
codegen_flags: <defaults>
</compile_context>

<pallas_src>
import jax
import jax.numpy as jnp
from jax.experimental import pallas as pl
from jax.experimental.pallas import tpu as pltpu

HIDDEN = 64


def qnetwork_kernel(x_ref, w1_ref, b1_ref, w2_ref, b2_ref, w3_ref, b3_ref, o_ref):
    """Fused relu(relu(x@W1+b1)@W2+b2)@W3+b3 on one (tile_b, state_size) batch tile."""
    x = x_ref[...].astype(jnp.bfloat16)                                # (tile_b, 37) bf16
    h1 = jnp.dot(x, w1_ref[...], preferred_element_type=jnp.float32) + b1_ref[...]
    h1 = jnp.maximum(h1, 0.0)
    h2 = jnp.dot(h1.astype(jnp.bfloat16), w2_ref[...],
                 preferred_element_type=jnp.float32) + b2_ref[...]
    h2 = jnp.maximum(h2, 0.0)
    q = jnp.dot(h2.astype(jnp.bfloat16), w3_ref[...],
                preferred_element_type=jnp.float32) + b3_ref[...]
    o_ref[...] = q                                                     # (tile_b, 4) f32


def _round_up(x, m):
    return (x + m - 1) // m * m


def _pick_tiling(batch, tile_b):
    """Choose (tile_b, padded_batch): rows multiple of 8, tile clamped to the batch,
    and >= 2 grid steps when the batch allows it (keeps both v7x TCs busy)."""
    rows = _round_up(max(batch, 1), 8)                 # f32 sublane granularity
    tb = min(_round_up(tile_b, 8), rows)
    if rows // tb < 2 and rows >= 16:
        tb = _round_up(rows // 2, 8)                   # split into >= 2 parallel tiles
    padded = _round_up(rows, tb)
    return tb, padded


def prepare_params(params):
    """One-time parameter prep: bf16 matmul operands, f32 (1, out) biases."""
    w1, b1, w2, b2, w3, b3 = params
    return (w1.astype(jnp.bfloat16), b1.astype(jnp.float32).reshape(1, -1),
            w2.astype(jnp.bfloat16), b2.astype(jnp.float32).reshape(1, -1),
            w3.astype(jnp.bfloat16), b3.astype(jnp.float32).reshape(1, -1))


def qnetwork_forward(state, prepared_params, *, tile_b=1024):
    """Forward pass. state: (batch, state_size) f32; prepared_params from prepare_params()."""
    w1, b1, w2, b2, w3, b3 = prepared_params
    batch, state_size = state.shape
    action_size = w3.shape[1]
    assert w1.shape == (state_size, HIDDEN) and w2.shape == (HIDDEN, HIDDEN)
    assert w3.shape == (HIDDEN, action_size)

    tb, padded_batch = _pick_tiling(batch, tile_b)
    x = state.astype(jnp.float32)
    if padded_batch != batch:
        x = jnp.pad(x, ((0, padded_batch - batch), (0, 0)))   # row padding only

    grid = (padded_batch // tb,)
    resident = lambda i: (0, 0)   # weights/biases: same block every step -> stay in VMEM

    flops = 2 * padded_batch * (state_size * HIDDEN + HIDDEN * HIDDEN + HIDDEN * action_size)
    weight_bytes = (state_size * HIDDEN + HIDDEN * HIDDEN + HIDDEN * action_size) * 2 \
                   + (2 * HIDDEN + action_size) * 4
    bytes_accessed = padded_batch * (state_size * 4 + action_size * 4) + weight_bytes

    out = pl.pallas_call(
        qnetwork_kernel,
        out_shape=jax.ShapeDtypeStruct((padded_batch, action_size), jnp.float32),
        grid_spec=pltpu.PrefetchScalarGridSpec(
            num_scalar_prefetch=0,
            grid=grid,
            in_specs=[
                pl.BlockSpec((tb, state_size), lambda i: (i, 0)),      # streamed f32 state
                pl.BlockSpec((state_size, HIDDEN), resident),          # w1 (bf16)
                pl.BlockSpec((1, HIDDEN), resident),                   # b1 (f32)
                pl.BlockSpec((HIDDEN, HIDDEN), resident),              # w2 (bf16)
                pl.BlockSpec((1, HIDDEN), resident),                   # b2 (f32)
                pl.BlockSpec((HIDDEN, action_size), resident),         # w3 (bf16)
                pl.BlockSpec((1, action_size), resident),              # b3 (f32)
            ],
            out_specs=pl.BlockSpec((tb, action_size), lambda i: (i, 0)),  # real 4-wide output
        ),
        compiler_params=pltpu.CompilerParams(
            dimension_semantics=("parallel",),   # batch tiles shard across v7x's 2 TCs
        ),
        cost_estimate=pl.CostEstimate(flops=flops, transcendentals=0,
                                      bytes_accessed=bytes_accessed),
    )(x, w1, b1, w2, b2, w3, b3)

    return out[:batch]


def init_params(key, state_size, action_size, hidden=HIDDEN):
    """PyTorch nn.Linear-style init: U(-1/sqrt(fan_in), 1/sqrt(fan_in)), weights as (in, out)."""
    def linear(key, fan_in, fan_out):
        kw, kb = jax.random.split(key)
        bound = 1.0 / jnp.sqrt(jnp.float32(fan_in))
        w = jax.random.uniform(kw, (fan_in, fan_out), jnp.float32, -bound, bound)
        b = jax.random.uniform(kb, (1, fan_out), jnp.float32, -bound, bound)
        return w, b

    k1, k2, k3 = jax.random.split(key, 3)
    w1, b1 = linear(k1, state_size, hidden)
    w2, b2 = linear(k2, hidden, hidden)
    w3, b3 = linear(k3, hidden, action_size)
    return (w1, b1, w2, b2, w3, b3)


def qnetwork_ref_f32(state, params):
    """Pure-f32 JAX reference (matches the PyTorch module)."""
    w1, b1, w2, b2, w3, b3 = params
    x = jnp.maximum(state @ w1 + b1, 0.0)
    x = jnp.maximum(x @ w2 + b2, 0.0)
    return x @ w3 + b3


def qnetwork_ref_bf16(state, params):
    """Reference matching the kernel's arithmetic (bf16 operands, f32 accumulation)."""
    w1, b1, w2, b2, w3, b3 = params
    bf = jnp.bfloat16
    x = state.astype(bf)
    h1 = jnp.maximum(jnp.dot(x, w1.astype(bf), preferred_element_type=jnp.float32) + b1, 0.0)
    h2 = jnp.maximum(jnp.dot(h1.astype(bf), w2.astype(bf),
                             preferred_element_type=jnp.float32) + b2, 0.0)
    return jnp.dot(h2.astype(bf), w3.astype(bf), preferred_element_type=jnp.float32) + b3


if __name__ == "__main__":
    state_size, action_size = 37, 4
    key = jax.random.PRNGKey(0)
    k_params, k_state = jax.random.split(key)

    params = init_params(k_params, state_size, action_size)
    prepped = prepare_params(params)

    # Small single-tile case (batch=8, grid=1).
    state = jax.random.normal(k_state, (8, state_size), jnp.float32)
    out = jax.block_until_ready(qnetwork_forward(state, prepped))
    assert out.shape == (8, action_size)
    assert jnp.allclose(out, qnetwork_ref_bf16(state, params), atol=5e-3, rtol=5e-3)
    assert jnp.allclose(out, qnetwork_ref_f32(state, params), atol=5e-2, rtol=5e-2)

    # Multi-tile case with row padding (batch=40 -> 2 parallel tiles of 24 rows).
    state2 = jax.random.normal(jax.random.fold_in(k_state, 1), (40, state_size), jnp.float32)
    out2 = jax.block_until_ready(qnetwork_forward(state2, prepped))
    assert out2.shape == (40, action_size)
    assert jnp.allclose(out2, qnetwork_ref_bf16(state2, params), atol=5e-3, rtol=5e-3)
    assert jnp.allclose(out2, qnetwork_ref_f32(state2, params), atol=5e-2, rtol=5e-2)

    print("KERNEL_OK")
</pallas_src>

<mosaic_0001>
module attributes {stable_mosaic.version = 11 : i64} {
  func.func @qnetwork_kernel(%arg0: i32, %arg1: memref<8x37xf32, #tpu.memory_space<vmem>>, %arg2: memref<37x64xbf16, #tpu.memory_space<vmem>>, %arg3: memref<1x64xf32, #tpu.memory_space<vmem>>, %arg4: memref<64x64xbf16, #tpu.memory_space<vmem>>, %arg5: memref<1x64xf32, #tpu.memory_space<vmem>>, %arg6: memref<64x4xbf16, #tpu.memory_space<vmem>>, %arg7: memref<1x4xf32, #tpu.memory_space<vmem>>, %arg8: memref<8x4xf32, #tpu.memory_space<vmem>>) attributes {dimension_semantics = [#tpu.dimension_semantics<parallel>], iteration_bounds = array<i64: 1>, scalar_prefetch = 0 : i64, scratch_operands = 0 : i64, tpu.core_type = #tpu.core_type<tc>, window_params = [{transform_indices = @transform_0, window_bounds = array<i64: 8, 37>}, {pipeline_mode = #tpu.pipeline_mode<synchronous>, transform_indices = @transform_1, window_bounds = array<i64: 37, 64>}, {pipeline_mode = #tpu.pipeline_mode<synchronous>, transform_indices = @transform_2, window_bounds = array<i64: 1, 64>}, {pipeline_mode = #tpu.pipeline_mode<synchronous>, transform_indices = @transform_3, window_bounds = array<i64: 64, 64>}, {pipeline_mode = #tpu.pipeline_mode<synchronous>, transform_indices = @transform_4, window_bounds = array<i64: 1, 64>}, {pipeline_mode = #tpu.pipeline_mode<synchronous>, transform_indices = @transform_5, window_bounds = array<i64: 64, 4>}, {pipeline_mode = #tpu.pipeline_mode<synchronous>, transform_indices = @transform_6, window_bounds = array<i64: 1, 4>}, {transform_indices = @transform_7, window_bounds = array<i64: 8, 4>}]} {
    %c0 = arith.constant 0 : index
    %c0_0 = arith.constant 0 : index
    %0 = vector.load %arg1[%c0, %c0_0] : memref<8x37xf32, #tpu.memory_space<vmem>>, vector<8x37xf32>
    %1 = arith.truncf %0 : vector<8x37xf32> to vector<8x37xbf16>
    %c0_1 = arith.constant 0 : index
    %c0_2 = arith.constant 0 : index
    %2 = vector.load %arg2[%c0_1, %c0_2] : memref<37x64xbf16, #tpu.memory_space<vmem>>, vector<37x64xbf16>
    %cst = arith.constant dense<0.000000e+00> : vector<8x64xf32>
    %3 = tpu.matmul %1, %2, %cst {dimension_numbers = #tpu.dot_dimension_numbers<[1], [0], [0], [1], [0, 0, 1, 1], [], []>} : vector<8x37xbf16>, vector<37x64xbf16>, vector<8x64xf32> -> vector<8x64xf32>
    %c0_3 = arith.constant 0 : index
    %c0_4 = arith.constant 0 : index
    %4 = vector.load %arg3[%c0_3, %c0_4] : memref<1x64xf32, #tpu.memory_space<vmem>>, vector<1x64xf32>
    %5 = vector.broadcast %4 : vector<1x64xf32> to vector<8x64xf32>
    %6 = arith.addf %3, %5 : vector<8x64xf32>
    %cst_5 = arith.constant 0.000000e+00 : f32
    %7 = vector.broadcast %cst_5 : f32 to vector<8x64xf32>
    %8 = arith.maximumf %6, %7 : vector<8x64xf32>
    %9 = arith.truncf %8 : vector<8x64xf32> to vector<8x64xbf16>
    %c0_6 = arith.constant 0 : index
    %c0_7 = arith.constant 0 : index
    %10 = vector.load %arg4[%c0_6, %c0_7] : memref<64x64xbf16, #tpu.memory_space<vmem>>, vector<64x64xbf16>
    %cst_8 = arith.constant dense<0.000000e+00> : vector<8x64xf32>
    %11 = tpu.matmul %9, %10, %cst_8 {dimension_numbers = #tpu.dot_dimension_numbers<[1], [0], [0], [1], [0, 0, 1, 1], [], []>} : vector<8x64xbf16>, vector<64x64xbf16>, vector<8x64xf32> -> vector<8x64xf32>
    %c0_9 = arith.constant 0 : index
    %c0_10 = arith.constant 0 : index
    %12 = vector.load %arg5[%c0_9, %c0_10] : memref<1x64xf32, #tpu.memory_space<vmem>>, vector<1x64xf32>
    %13 = vector.broadcast %12 : vector<1x64xf32> to vector<8x64xf32>
    %14 = arith.addf %11, %13 : vector<8x64xf32>
    %cst_11 = arith.constant 0.000000e+00 : f32
    %15 = vector.broadcast %cst_11 : f32 to vector<8x64xf32>
    %16 = arith.maximumf %14, %15 : vector<8x64xf32>
    %17 = arith.truncf %16 : vector<8x64xf32> to vector<8x64xbf16>
    %c0_12 = arith.constant 0 : index
    %c0_13 = arith.constant 0 : index
    %18 = vector.load %arg6[%c0_12, %c0_13] : memref<64x4xbf16, #tpu.memory_space<vmem>>, vector<64x4xbf16>
    %cst_14 = arith.constant dense<0.000000e+00> : vector<8x4xf32>
    %19 = tpu.matmul %17, %18, %cst_14 {dimension_numbers = #tpu.dot_dimension_numbers<[1], [0], [0], [1], [0, 0, 1, 1], [], []>} : vector<8x64xbf16>, vector<64x4xbf16>, vector<8x4xf32> -> vector<8x4xf32>
    %c0_15 = arith.constant 0 : index
    %c0_16 = arith.constant 0 : index
    %20 = vector.load %arg7[%c0_15, %c0_16] : memref<1x4xf32, #tpu.memory_space<vmem>>, vector<1x4xf32>
    %21 = vector.broadcast %20 : vector<1x4xf32> to vector<8x4xf32>
    %22 = arith.addf %19, %21 : vector<8x4xf32>
    %c0_17 = arith.constant 0 : index
    %c0_18 = arith.constant 0 : index
    %23 = vector.load %arg8[%c0_17, %c0_18] : memref<8x4xf32, #tpu.memory_space<vmem>>, vector<8x4xf32>
    tpu.vector_store %arg8[%c0_17, %c0_18], %22 {strides = array<i32>} : memref<8x4xf32, #tpu.memory_space<vmem>>, vector<8x4xf32>,
    return
  }
  func.func @transform_0(%arg0: i32) -> (i32, i32) {
    %c0_i32 = arith.constant 0 : i32
    %c0_i32_0 = arith.constant 0 : i32
    return %arg0, %c0_i32 : i32, i32
  }
  func.func @transform_1(%arg0: i32) -> (i32, i32) {
    %c0_i32 = arith.constant 0 : i32
    %c0_i32_0 = arith.constant 0 : i32
    %c0_i32_1 = arith.constant 0 : i32
    return %c0_i32, %c0_i32_0 : i32, i32
  }
  func.func @transform_2(%arg0: i32) -> (i32, i32) {
    %c0_i32 = arith.constant 0 : i32
    %c0_i32_0 = arith.constant 0 : i32
    %c0_i32_1 = arith.constant 0 : i32
    return %c0_i32, %c0_i32_0 : i32, i32
  }
  func.func @transform_3(%arg0: i32) -> (i32, i32) {
    %c0_i32 = arith.constant 0 : i32
    %c0_i32_0 = arith.constant 0 : i32
    %c0_i32_1 = arith.constant 0 : i32
    return %c0_i32, %c0_i32_0 : i32, i32
  }
  func.func @transform_4(%arg0: i32) -> (i32, i32) {
    %c0_i32 = arith.constant 0 : i32
    %c0_i32_0 = arith.constant 0 : i32
    %c0_i32_1 = arith.constant 0 : i32
    return %c0_i32, %c0_i32_0 : i32, i32
  }
  func.func @transform_5(%arg0: i32) -> (i32, i32) {
    %c0_i32 = arith.constant 0 : i32
    %c0_i32_0 = arith.constant 0 : i32
    %c0_i32_1 = arith.constant 0 : i32
    return %c0_i32, %c0_i32_0 : i32, i32
  }
  func.func @transform_6(%arg0: i32) -> (i32, i32) {
    %c0_i32 = arith.constant 0 : i32
    %c0_i32_0 = arith.constant 0 : i32
    %c0_i32_1 = arith.constant 0 : i32
    return %c0_i32, %c0_i32_0 : i32, i32
  }
  func.func @transform_7(%arg0: i32) -> (i32, i32) {
    %c0_i32 = arith.constant 0 : i32
    %c0_i32_0 = arith.constant 0 : i32
    return %arg0, %c0_i32 : i32, i32
  }
}

</mosaic_0001>

<llo_original>
// kernel: tpu_custom_call.1
$region0: #{tpu_custom_call.1}
  #allocation0 [shape = 'u32[]', space=smem, size = 0x4, offset = 0x4, fixed_abs, tag = 'smem constant byte address 0x4 - core index']
  #allocation1 [shape = 'u32[144,128]{1,0:T(1,128)}', space=vmem, size = 0x12000, scoped, tag = 'internal scratch']
  %s0 = inlined_call_operand.vmem [shape: f32[8,37], index: 0, kind: input, shape index: {}]
  %s1 = inlined_call_operand.hbm [shape: bf16[37,64], index: 1, kind: input, shape index: {}]
  %s2 = inlined_call_operand.vmem [shape: f32[1,64], index: 2, kind: input, shape index: {}]
  %s3 = inlined_call_operand.vmem [shape: bf16[64,64], index: 3, kind: input, shape index: {}]
  %s4 = inlined_call_operand.vmem [shape: f32[1,64], index: 4, kind: input, shape index: {}]
  %s5 = inlined_call_operand.vmem [shape: bf16[64,4], index: 5, kind: input, shape index: {}]
  %s6 = inlined_call_operand.vmem [shape: f32[1,4], index: 6, kind: input, shape index: {}]
  %s7 = inlined_call_operand.vmem [shape: f32[8,4], index: 7, kind: output, shape index: {}]
  %s8 = sld [smem:[#allocation0]]
  $region42: #{tpu_custom_call.1} parent=0
    _
  %s10 = ssub.s32 1, %s8
  %s11 = scalar_select 0, %s10, %s8
  $region1: #{tpu_custom_call.1} parent=0
    #allocation2 [shape = 'u8[10240]{0}', space=vmem, size = 0x2800, scoped, tag = 'input window, operand 1, single buffered']
    #allocation3 [shape = 's32[1]{0}', space=sflag, size = 0x4, scoped, tag = 'scoped memory for tpu_custom_call.1']
    %12 = vsyncpa [#allocation3], 0
    // Predicated region
    $region2: #{tpu_custom_call.1} parent=1 // pred_check
      _
    $region3: #{tpu_custom_call.1} parent=1 // pred_check_branch
      %14 = sbr.rel (0) target = $region5
    $region4: #{tpu_custom_call.1} parent=1 // pred_region
      _
    $region5: #{tpu_custom_call.1} parent=1 // pred_fallthru
      _
    // Predicated region
    $region6: #{tpu_custom_call.1} parent=1 // pred_check
      _
    $region7: #{tpu_custom_call.1} parent=1 // pred_check_branch
      %16 = sbr.rel (0) target = $region9
    $region8: #{tpu_custom_call.1} parent=1 // pred_region
      %s18 = ssub.s32 320, 320
      %19 = vsyncadd [#allocation3], %s18
      %s20 = sshll.u32 [#allocation2], 4
      %s21 = int_to_ptr.vmem [resolvable:$true] %s20
      %26 = dma.hbm_to_vmem [thread:$0]  %s1, 320, %s21, [#allocation3], 64, 64, 4
    $region9: #{tpu_custom_call.1} parent=1 // pred_fallthru
      _
    // Predicated region
    $region10: #{tpu_custom_call.1} parent=1 // pred_check
      _
    $region11: #{tpu_custom_call.1} parent=1 // pred_check_branch
      %28 = sbr.rel (0) target = $region13
    $region12: #{tpu_custom_call.1} parent=1 // pred_region
      _
    $region13: #{tpu_custom_call.1} parent=1 // pred_fallthru
      _
    // Predicated region
    $region14: #{tpu_custom_call.1} parent=1 // pred_check
      _
    $region15: #{tpu_custom_call.1} parent=1 // pred_check_branch
      %30 = sbr.rel (0) target = $region17
    $region16: #{tpu_custom_call.1} parent=1 // pred_region
      _
    $region17: #{tpu_custom_call.1} parent=1 // pred_fallthru
      _
    // Predicated region
    $region18: #{tpu_custom_call.1} parent=1 // pred_check
      _
    $region19: #{tpu_custom_call.1} parent=1 // pred_check_branch
      %32 = sbr.rel (0) target = $region21
    $region20: #{tpu_custom_call.1} parent=1 // pred_region
      _
    $region21: #{tpu_custom_call.1} parent=1 // pred_fallthru
      _
    // Predicated region
    $region22: #{tpu_custom_call.1} parent=1 // pred_check
      _
    $region23: #{tpu_custom_call.1} parent=1 // pred_check_branch
      %34 = sbr.rel (0) target = $region25
    $region24: #{tpu_custom_call.1} parent=1 // pred_region
      _
    $region25: #{tpu_custom_call.1} parent=1 // pred_fallthru
      _
    // Predicated region
    $region26: #{tpu_custom_call.1} parent=1 // pred_check
      _
    $region27: #{tpu_custom_call.1} parent=1 // pred_check_branch
      %36 = sbr.rel (0) target = $region29
    $region28: #{tpu_custom_call.1} parent=1 // pred_region
      _
    $region29: #{tpu_custom_call.1} parent=1 // pred_fallthru
      _
    // Predicated region
    $region30: #{tpu_custom_call.1} parent=1 // pred_check
      _
    $region31: #{tpu_custom_call.1} parent=1 // pred_check_branch
      %38 = sbr.rel (0) target = $region33
    $region32: #{tpu_custom_call.1} parent=1 // pred_region
      %39 = dma.done [#allocation3], 320
    $region33: #{tpu_custom_call.1} parent=1 // pred_fallthru
      _
    %v41 = vld [vmem:[%s0] sm:$0xff]
    %v42 = vpack.c.bf16 %v41, %v41
    %v43 = vld [vmem:[#allocation2] sm:$0xf]
    %v44 = vld [vmem:[#allocation2 + $0x4] sm:$0xf]
    %v45 = vld [vmem:[#allocation2 + $0x8] sm:$0xf]
    %v46 = vld [vmem:[#allocation2 + $0xc] sm:$0xf]
    %v47 = vld [vmem:[#allocation2 + $0x10] sm:$0x7]
    %v48 = vld [vmem:[%s2] sm:$0x1]
    %v50 = vlaneseq
    %v51 = vshrl.u32 %v50, 7
    %v52 = vsub.s32 0, %v51
    %v53 = vrot.slane %v48, %v52
    %v60 = vunpack.c.l.b16 %v43
    %v61 = vunpack.c.l.b16 %v44
    %v62 = vunpack.c.l.b16 %v45
    %v63 = vunpack.c.l.b16 %v46
    %v64 = vunpack.c.l.b16 %v47
    %v65 = vpack.c.b16 %v61, %v60
    %v66 = vpack.c.b16 %v63, %v62
    %v67 = vpack.c.b16 %v64, %v64
    %vm70 = vcmask 302080
    %v72 = vsel %vm70, %v42, 0
    %vm74 = vcmask 1041408
    %vm75 = vcmask 1042432
    %v76 = vsel %vm74, 4294967295, 65535
    %v77 = vsel %vm75, %v76, 0
    %v79 = vand.u32 %v67, %v77
    %81 = vmatprep.subr.bf16.mxu0 0
    %82 = vmatpush1.bf16.msra.mxu0 %v65
    %83 = vmatprep.subr.bf16.mxu0 0
    %84 = vmatpush1.bf16.msra.mxu0 %v66
    %85 = vmatprep.subr.bf16.mxu0 0
    %86 = vmatpush1.bf16.msra.mxu0 %v79
    %87 = vmatprep.subr.bf16.mxu0 0
    %88 = vmatpush1.bf16.msra.mxu0 0
    %89 = vmatprep.subr.bf16.mxu0 0
    %90 = vmatpush1.bf16.msra.mxu0 0
    %91 = vmatprep.subr.bf16.mxu0 0
    %92 = vmatpush1.bf16.msra.mxu0 0
    %93 = vmatprep.subr.bf16.mxu0 0
    %94 = vmatpush1.bf16.msra.mxu0 0
    %95 = vmatprep.subr.bf16.mxu0 0
    %96 = vmatpush1.bf16.msra.mxu0 0
    %97 = vmatprep.subr.bf16.mxu0 0
    %98 = vmatpush1.bf16.msra.mxu0 0
    %99 = vmatprep.subr.bf16.mxu0 0
    %100 = vmatpush1.bf16.msra.mxu0 0
    %101 = vmatprep.subr.bf16.mxu0 0
    %102 = vmatpush1.bf16.msra.mxu0 0
    %103 = vmatprep.subr.bf16.mxu0 0
    %104 = vmatpush1.bf16.msra.mxu0 0
    %105 = vmatprep.subr.bf16.mxu0 0
    %106 = vmatpush1.bf16.msra.mxu0 0
    %107 = vmatprep.subr.bf16.mxu0 0
    %108 = vmatpush1.bf16.msra.mxu0 0
    %109 = vmatprep.subr.bf16.mxu0 0
    %110 = vmatpush1.bf16.msra.mxu0 0
    %111 = vmatprep.subr.bf16.mxu0 0
    %112 = vmatpush1.bf16.msra.mxu0 0
    %113 = vmatprep.mubr.bf16.mxu0 0
    %114 = vmatmul.mubr.bf16.gmra.mrb[0].mxu0 %v72
    %v115 = vpop.f32.mrb[0].mxu0
    %v116 = vadd.f32 %v53, %v115
    %v117 = vpop.f32.mrb[0].mxu0
    %v118 = vpop.f32.mrb[0].mxu0
    %v119 = vpop.f32.mrb[0].mxu0
    %120 = vdwg.mxu0
    %v121 = vmax.f32 %v116, 0.0
    %v122 = vpack.c.bf16 %v121, %v121
    %v123 = vld [vmem:[%s3] sm:$0xf]
    %v124 = vld [vmem:[%s3 + $0x4] sm:$0xf]
    %v125 = vld [vmem:[%s3 + $0x8] sm:$0xf]
    %v126 = vld [vmem:[%s3 + $0xc] sm:$0xf]
    %v127 = vld [vmem:[%s3 + $0x10] sm:$0xf]
    %v128 = vld [vmem:[%s3 + $0x14] sm:$0xf]
    %v129 = vld [vmem:[%s3 + $0x18] sm:$0xf]
    %v130 = vld [vmem:[%s3 + $0x1c] sm:$0xf]
    %v131 = vld [vmem:[%s4] sm:$0x1]
    %v133 = vlaneseq
    %v134 = vshrl.u32 %v133, 7
    %v135 = vsub.s32 0, %v134
    %v136 = vrot.slane %v131, %v135
    %v146 = vunpack.c.l.b16 %v123
    %v147 = vunpack.c.l.b16 %v124
    %v148 = vunpack.c.l.b16 %v125
    %v149 = vunpack.c.l.b16 %v126
    %v150 = vunpack.c.l.b16 %v127
    %v151 = vunpack.c.l.b16 %v128
    %v152 = vunpack.c.l.b16 %v129
    %v153 = vunpack.c.l.b16 %v130
    %v154 = vpack.c.b16 %v147, %v146
    %v155 = vpack.c.b16 %v149, %v148
    %v156 = vpack.c.b16 %v151, %v150
    %v157 = vpack.c.b16 %v153, %v152
    %vm162 = vcmask 523264
    %v164 = vsel %vm162, %v122, 0
    %166 = vmatprep.subr.bf16.mxu0 0
    %167 = vmatpush1.bf16.msra.mxu0 %v154
    %168 = vmatprep.subr.bf16.mxu0 0
    %169 = vmatpush1.bf16.msra.mxu0 %v155
    %170 = vmatprep.subr.bf16.mxu0 0
    %171 = vmatpush1.bf16.msra.mxu0 %v156
    %172 = vmatprep.subr.bf16.mxu0 0
    %173 = vmatpush1.bf16.msra.mxu0 %v157
    %174 = vmatprep.subr.bf16.mxu0 0
    %175 = vmatpush1.bf16.msra.mxu0 0
    %176 = vmatprep.subr.bf16.mxu0 0
    %177 = vmatpush1.bf16.msra.mxu0 0
    %178 = vmatprep.subr.bf16.mxu0 0
    %179 = vmatpush1.bf16.msra.mxu0 0
    %180 = vmatprep.subr.bf16.mxu0 0
    %181 = vmatpush1.bf16.msra.mxu0 0
    %182 = vmatprep.subr.bf16.mxu0 0
    %183 = vmatpush1.bf16.msra.mxu0 0
    %184 = vmatprep.subr.bf16.mxu0 0
    %185 = vmatpush1.bf16.msra.mxu0 0
    %186 = vmatprep.subr.bf16.mxu0 0
    %187 = vmatpush1.bf16.msra.mxu0 0
    %188 = vmatprep.subr.bf16.mxu0 0
    %189 = vmatpush1.bf16.msra.mxu0 0
    %190 = vmatprep.subr.bf16.mxu0 0
    %191 = vmatpush1.bf16.msra.mxu0 0
    %192 = vmatprep.subr.bf16.mxu0 0
    %193 = vmatpush1.bf16.msra.mxu0 0
    %194 = vmatprep.subr.bf16.mxu0 0
    %195 = vmatpush1.bf16.msra.mxu0 0
    %196 = vmatprep.subr.bf16.mxu0 0
    %197 = vmatpush1.bf16.msra.mxu0 0
    %198 = vmatprep.mubr.bf16.mxu0 0
    %199 = vmatmul.mubr.bf16.gmra.mrb[0].mxu0 %v164
    %v200 = vpop.f32.mrb[0].mxu0
    %v201 = vadd.f32 %v136, %v200
    %v202 = vpop.f32.mrb[0].mxu0
    %v203 = vpop.f32.mrb[0].mxu0
    %v204 = vpop.f32.mrb[0].mxu0
    %205 = vdwg.mxu0
    %v206 = vmax.f32 %v201, 0.0
    %v207 = vpack.c.bf16 %v206, %v206
    %v208 = vld [vmem:[%s5] sm:$0xf]
    %v209 = vld [vmem:[%s5 + $0x4] sm:$0xf]
    %v210 = vld [vmem:[%s5 + $0x8] sm:$0xf]
    %v211 = vld [vmem:[%s5 + $0xc] sm:$0xf]
    %v212 = vld [vmem:[%s5 + $0x10] sm:$0xf]
    %v213 = vld [vmem:[%s5 + $0x14] sm:$0xf]
    %v214 = vld [vmem:[%s5 + $0x18] sm:$0xf]
    %v215 = vld [vmem:[%s5 + $0x1c] sm:$0xf]
    %v216 = vld [vmem:[%s6] sm:$0x1]
    %v218 = vlaneseq
    %v219 = vshrl.u32 %v218, 7
    %v220 = vsub.s32 0, %v219
    %v221 = vrot.slane %v216, %v220
    %v231 = vunpack.c.l.b16 %v208
    %v232 = vunpack.c.l.b16 %v209
    %v233 = vunpack.c.l.b16 %v210
    %v234 = vunpack.c.l.b16 %v211
    %v235 = vunpack.c.l.b16 %v212
    %v236 = vunpack.c.l.b16 %v213
    %v237 = vunpack.c.l.b16 %v214
    %v238 = vunpack.c.l.b16 %v215
    %v239 = vpack.c.b16 %v232, %v231
    %v240 = vpack.c.b16 %v234, %v233
    %v241 = vpack.c.b16 %v236, %v235
    %v242 = vpack.c.b16 %v238, %v237
    %v248 = vsel %vm162, %v207, 0
    %250 = vmatprep.subr.bf16.mxu0 0
    %251 = vmatpush1.bf16.msra.mxu0 %v239
    %252 = vmatprep.subr.bf16.mxu0 0
    %253 = vmatpush1.bf16.msra.mxu0 %v240
    %254 = vmatprep.subr.bf16.mxu0 0
    %255 = vmatpush1.bf16.msra.mxu0 %v241
    %256 = vmatprep.subr.bf16.mxu0 0
    %257 = vmatpush1.bf16.msra.mxu0 %v242
    %258 = vmatprep.subr.bf16.mxu0 0
    %259 = vmatpush1.bf16.msra.mxu0 0
    %260 = vmatprep.subr.bf16.mxu0 0
    %261 = vmatpush1.bf16.msra.mxu0 0
    %262 = vmatprep.subr.bf16.mxu0 0
    %263 = vmatpush1.bf16.msra.mxu0 0
    %264 = vmatprep.subr.bf16.mxu0 0
    %265 = vmatpush1.bf16.msra.mxu0 0
    %266 = vmatprep.subr.bf16.mxu0 0
    %267 = vmatpush1.bf16.msra.mxu0 0
    %268 = vmatprep.subr.bf16.mxu0 0
    %269 = vmatpush1.bf16.msra.mxu0 0
    %270 = vmatprep.subr.bf16.mxu0 0
    %271 = vmatpush1.bf16.msra.mxu0 0
    %272 = vmatprep.subr.bf16.mxu0 0
    %273 = vmatpush1.bf16.msra.mxu0 0
    %274 = vmatprep.subr.bf16.mxu0 0
    %275 = vmatpush1.bf16.msra.mxu0 0
    %276 = vmatprep.subr.bf16.mxu0 0
    %277 = vmatpush1.bf16.msra.mxu0 0
    %278 = vmatprep.subr.bf16.mxu0 0
    %279 = vmatpush1.bf16.msra.mxu0 0
    %280 = vmatprep.subr.bf16.mxu0 0
    %281 = vmatpush1.bf16.msra.mxu0 0
    %282 = vmatprep.mubr.bf16.mxu0 0
    %283 = vmatmul.mubr.bf16.gmra.mrb[0].mxu0 %v248
    %v284 = vpop.f32.mrb[0].mxu0
    %v285 = vadd.f32 %v221, %v284
    %v286 = vpop.f32.mrb[0].mxu0
    %v287 = vpop.f32.mrb[0].mxu0
    %v288 = vpop.f32.mrb[0].mxu0
    %289 = vdwg.mxu0
    %vm290 = vcmask 31744
    %291 = vst.msk [vmem:[%s7] sm:$0xff] %vm290, %v285
    // Predicated region
    $region34: #{tpu_custom_call.1} parent=1 // pred_check
      _
    $region35: #{tpu_custom_call.1} parent=1 // pred_check_branch
      %293 = sbr.rel (0) target = $region37
    $region36: #{tpu_custom_call.1} parent=1 // pred_region
      _
    $region37: #{tpu_custom_call.1} parent=1 // pred_fallthru
      _
    // Predicated region
    $region38: #{tpu_custom_call.1} parent=1 // pred_check
      _
    $region39: #{tpu_custom_call.1} parent=1 // pred_check_branch
      %295 = sbr.rel (0) target = $region41
    $region40: #{tpu_custom_call.1} parent=1 // pred_region
      _
    $region41: #{tpu_custom_call.1} parent=1 // pred_fallthru
      _
    %296 = vsyncpa [#allocation3], 1

</llo_original>
